<compile_context>
chip_gen: v5e
topology: v5e:2x2
jax: 0.10.0
libtpu: 0.0.40
codegen_flags: <defaults>
</compile_context>

<pallas_src>
import functools
import math

import jax
import jax.numpy as jnp
from jax import lax
from jax.experimental import pallas as pl
from jax.experimental.pallas import tpu as pltpu

block_size = 8
n_embd = 32
vocab_size = 65          # synthetic vocab (e.g. tiny-shakespeare char set size)
V_PAD = 128              # vocab padded to a full 128-lane vreg
NEG_INF = -1e30          # finite "-inf" for pad vocab columns (softmax-safe, no NaNs)


def _round_up(x, m):
    return ((x + m - 1) // m) * m


# --------------------------------------------------------------------------------------
# Kernels
# --------------------------------------------------------------------------------------
def _compute_logits_tile(idx_ref, fused_tok_ref, pos_ref):
    """Raw (TILE, V_PAD) f32 logits for one row tile (pad vocab columns not yet masked)."""
    ids = idx_ref[...][0, 0:1, :]                         # (1, TILE) int32 (sublane 0)
    v_pad = fused_tok_ref.shape[-1]
    tile = ids.shape[-1]
    t = pos_ref.shape[0]

    # Transposed one-hot: rows along lanes, vocab along sublanes -> pure VPU compare.
    vocab_iota = lax.broadcasted_iota(jnp.int32, (v_pad, tile), 0)
    onehot_t = (vocab_iota == ids).astype(jnp.bfloat16)   # (V_PAD, TILE), exact 0/1

    # One aligned MXU matmul: logits[r, n] = fused_tok[ids[r], n]  (f32 accumulation).
    tok_logits = lax.dot_general(
        onehot_t, fused_tok_ref[...],
        dimension_numbers=(((0,), (0,)), ((), ())),
        preferred_element_type=jnp.float32)               # (TILE, V_PAD) f32

    # Periodic position add: flattened row r has position r % T and TILE % T == 0, so view
    # the tile as (TILE//T, T, V_PAD) and broadcast-add the tiny (T, V_PAD) block.
    # T == 8 -> sublane-aligned reshape, no data movement (replaces the old DMA'd
    # (TILE, V_PAD) resident position buffer).
    tok3 = tok_logits.reshape(tile // t, t, v_pad)
    return (tok3 + pos_ref[...][None, :, :]).reshape(tile, v_pad)


def bigram_logits_kernel(idx_ref, fused_tok_ref, pos_ref, out_ref):
    """Inference path: logits only."""
    logits = _compute_logits_tile(idx_ref, fused_tok_ref, pos_ref)
    col = lax.broadcasted_iota(jnp.int32, logits.shape, 1)
    # Mask pad vocab columns so the lane-padded (.., 128) logits are directly
    # softmax/argmax-safe downstream (no slicing needed before a softmax).
    out_ref[...] = jnp.where(col < vocab_size, logits, jnp.float32(NEG_INF))


def bigram_loss_kernel(idx_ref, tgt_ref, fused_tok_ref, pos_ref, out_ref, loss_ref,
                       *, bt_valid):
    """Training path: logits + fused cross-entropy partial sum for this tile."""
    logits = _compute_logits_tile(idx_ref, fused_tok_ref, pos_ref)   # (TILE, V_PAD) f32
    tile, v_pad = logits.shape
    row0 = pl.program_id(0) * tile

    col = lax.broadcasted_iota(jnp.int32, (tile, v_pad), 1)
    logits_m = jnp.where(col < vocab_size, logits, jnp.float32(NEG_INF))
    out_ref[...] = logits_m

    # Per-row logsumexp over the pad-masked 128-lane vocab (pad cols underflow to 0).
    m = jnp.max(logits_m, axis=-1, keepdims=True)                    # (TILE, 1)
    lse = m + jnp.log(jnp.sum(jnp.exp(logits_m - m), axis=-1, keepdims=True))
    valid_rows = (lax.broadcasted_iota(jnp.int32, (tile, 1), 0) + row0) < bt_valid
    sum_lse = jnp.sum(jnp.where(valid_rows, lse, 0.0), axis=0, keepdims=True)   # (1, 1)

    # sum_r logits[r, tgt_r] over valid rows via an MXU "trace" trick:
    #   G = onehot_tgt_t @ logits  (contract over rows), then sum the diagonal.
    # This avoids any lane->sublane relayout of the lane-dense targets.
    tgt = tgt_ref[...][0, 0:1, :]                                    # (1, TILE) int32
    valid_lane = (lax.broadcasted_iota(jnp.int32, (1, tile), 1) + row0) < bt_valid
    vocab_iota = lax.broadcasted_iota(jnp.int32, (v_pad, tile), 0)
    onehot_tgt = jnp.logical_and(vocab_iota == tgt, valid_lane).astype(jnp.float32)
    g = lax.dot_general(onehot_tgt, logits,
                        dimension_numbers=(((1,), (0,)), ((), ())),
                        preferred_element_type=jnp.float32)          # (V_PAD, V_PAD)
    eye = (lax.broadcasted_iota(jnp.int32, (v_pad, v_pad), 0) ==
           lax.broadcasted_iota(jnp.int32, (v_pad, v_pad), 1)).astype(jnp.float32)
    sum_tgt = jnp.sum(jnp.sum(g * eye, axis=1, keepdims=True), axis=0, keepdims=True)

    tile_loss = sum_lse - sum_tgt                                    # (1, 1) f32
    loss_ref[...] = jnp.broadcast_to(tile_loss.reshape(1, 1, 1), loss_ref.shape)


# --------------------------------------------------------------------------------------
# Wrapper
# --------------------------------------------------------------------------------------
def fuse_params(params):
    """Parameter-time precompute: fold both embedding tables through the lm_head."""
    tok_tab, pos_tab, w_t, b = params
    V = tok_tab.shape[0]
    fused_tok = tok_tab @ w_t + b[None, :]                # (V, V) f32
    fused_pos = pos_tab @ w_t                             # (block_size, V) f32
    fused_tok_p = jnp.zeros((V_PAD, V_PAD), jnp.float32).at[:V, :V].set(fused_tok)
    fused_pos_p = jnp.zeros((block_size, V_PAD), jnp.float32).at[:, :V].set(fused_pos)
    return fused_tok_p.astype(jnp.bfloat16), fused_pos_p


def _tile_rows(BT, T):
    row_align = math.lcm(8, T)            # sublane alignment & position-period alignment
    tile_bt = min(4096, _round_up(BT, row_align))
    tile_bt = _round_up(tile_bt, row_align)
    # Keep >= 2 grid steps whenever there is enough work so the "parallel" axis can shard
    # across v7x's two TensorCores; on 1-TC chips (v5e/v6e) the extra step is ~0.35us noise.
    if _round_up(BT, tile_bt) // tile_bt < 2 and tile_bt >= 2 * row_align:
        tile_bt = _round_up(tile_bt // 2, row_align)
    bt_pad = _round_up(BT, tile_bt)
    return tile_bt, bt_pad, bt_pad // tile_bt


def _ids_to_blocks(flat_ids, bt_pad, num_tiles, tile_bt):
    padded = jnp.pad(flat_ids.astype(jnp.int32), (0, bt_pad - flat_ids.shape[0]))
    blocks = padded.reshape(num_tiles, 1, tile_bt)
    # Replicate across 8 sublanes so every BlockSpec obeys the (8,128)/full-dim rule
    # independent of tile size (tiny int32 array, negligible extra traffic).
    return jnp.broadcast_to(blocks, (num_tiles, 8, tile_bt))


def bigram_forward(idx, fused, targets=None):
    """Mirrors BigramLanguageModel.forward."""
    fused_tok_p, fused_pos_p = fused
    B, T = idx.shape
    assert T <= block_size
    BT = B * T
    tile_bt, bt_pad, num_tiles = _tile_rows(BT, T)

    idx_blocks = _ids_to_blocks(idx.reshape(BT), bt_pad, num_tiles, tile_bt)
    pos_block = fused_pos_p[:T]                           # (T, V_PAD) f32, resident

    ids_spec = pl.BlockSpec((1, 8, tile_bt), lambda i: (i, 0, 0))
    tok_spec = pl.BlockSpec((V_PAD, V_PAD), lambda i: (0, 0))
    pos_spec = pl.BlockSpec((T, V_PAD), lambda i: (0, 0))
    logits_spec = pl.BlockSpec((tile_bt, V_PAD), lambda i: (i, 0))
    cparams = pltpu.CompilerParams(
        dimension_semantics=("parallel",),                # tiles are independent
        vmem_limit_bytes=32 * 1024 * 1024)                # ~12 MiB used at TILE=4096

    if targets is None:
        logits_pad = pl.pallas_call(
            bigram_logits_kernel,
            out_shape=jax.ShapeDtypeStruct((bt_pad, V_PAD), jnp.float32),
            grid_spec=pltpu.PrefetchScalarGridSpec(
                num_scalar_prefetch=0, grid=(num_tiles,),
                in_specs=[ids_spec, tok_spec, pos_spec],
                out_specs=logits_spec),
            compiler_params=cparams,
        )(idx_blocks, fused_tok_p, pos_block)
        # Only remaining post-kernel HBM copy: materializing the module's exact (B,T,V)
        # return shape.  Callers that can consume 128-lane padded logits (pad cols are
        # -1e30, softmax-safe) should use logits_pad directly and skip this.
        logits = logits_pad[:BT, :vocab_size].reshape(B, T, vocab_size)
        return logits, None

    tgt_blocks = _ids_to_blocks(targets.reshape(BT), bt_pad, num_tiles, tile_bt)
    logits_pad, loss_part = pl.pallas_call(
        functools.partial(bigram_loss_kernel, bt_valid=BT),
        out_shape=(jax.ShapeDtypeStruct((bt_pad, V_PAD), jnp.float32),
                   jax.ShapeDtypeStruct((num_tiles, 8, V_PAD), jnp.float32)),
        grid_spec=pltpu.PrefetchScalarGridSpec(
            num_scalar_prefetch=0, grid=(num_tiles,),
            in_specs=[ids_spec, ids_spec, tok_spec, pos_spec],
            out_specs=[logits_spec,
                       pl.BlockSpec((1, 8, V_PAD), lambda i: (i, 0, 0))]),
        compiler_params=cparams,
    )(idx_blocks, tgt_blocks, fused_tok_p, pos_block)
    loss = jnp.sum(loss_part[:, 0, 0]) / BT
    # PyTorch returns the (B*T, C) view of the logits when targets are given.
    logits = logits_pad[:BT, :vocab_size]
    return logits, loss


# --------------------------------------------------------------------------------------
# Reference / init
# --------------------------------------------------------------------------------------
def init_params(key):
    k1, k2, k3, k4 = jax.random.split(key, 4)
    tok_tab = jax.random.normal(k1, (vocab_size, n_embd), dtype=jnp.float32)   # Embedding N(0,1)
    pos_tab = jax.random.normal(k2, (block_size, n_embd), dtype=jnp.float32)
    bound = 1.0 / jnp.sqrt(jnp.float32(n_embd))                                # Linear U(+-1/sqrt(fan_in))
    w = jax.random.uniform(k3, (vocab_size, n_embd), jnp.float32, -bound, bound)
    b = jax.random.uniform(k4, (vocab_size,), jnp.float32, -bound, bound)
    return tok_tab, pos_tab, w.T, b


def reference_forward(idx, params):
    tok_tab, pos_tab, w_t, b = params
    B, T = idx.shape
    x = tok_tab[idx] + pos_tab[jnp.arange(T)][None, :, :]
    return x @ w_t + b                                   # (B, T, V) pure f32


def reference_fused(idx, fused):
    """Reference using the same bf16-rounded fused table (tight-tolerance check)."""
    fused_tok_p, fused_pos_p = fused
    T = idx.shape[1]
    ft = fused_tok_p.astype(jnp.float32)[:vocab_size, :vocab_size]
    fp = fused_pos_p[:T, :vocab_size]
    return ft[idx] + fp[None, :, :]


def _reference_loss(idx, tgt, fused):
    lf = reference_fused(idx, fused).reshape(-1, vocab_size)
    lp = jax.nn.log_softmax(lf, axis=-1)
    return -jnp.mean(jnp.take_along_axis(lp, tgt.reshape(-1)[:, None], axis=1))


# TODO(synk): generate() (autoregressive torch.multinomial sampling loop) is host-side
# control flow and is not implemented as a kernel.
if __name__ == "__main__":
    key = jax.random.PRNGKey(0)
    pkey, k1, k2, k3, tkey, tkey2 = jax.random.split(key, 6)
    params = init_params(pkey)
    fused = fuse_params(params)

    # --- small shape consistent with the module: B=2, T=block_size=8 ---
    B, T = 2, block_size
    idx = jax.random.randint(k1, (B, T), 0, vocab_size, dtype=jnp.int32)
    logits, loss = bigram_forward(idx, fused, targets=None)
    logits = jax.block_until_ready(logits)
    assert logits.shape == (B, T, vocab_size) and loss is None
    assert jnp.allclose(logits, reference_fused(idx, fused), atol=1e-4, rtol=1e-4)
    assert jnp.allclose(logits, reference_forward(idx, params), atol=3e-2, rtol=3e-2)

    # --- training path: fused in-kernel cross-entropy ---
    targets = jax.random.randint(tkey, (B, T), 0, vocab_size, dtype=jnp.int32)
    logits2d, loss2 = bigram_forward(idx, fused, targets=targets)
    loss2 = jax.block_until_ready(loss2)
    assert logits2d.shape == (B * T, vocab_size)
    assert bool(jnp.isfinite(loss2))
    assert jnp.allclose(loss2, _reference_loss(idx, targets, fused), atol=1e-4, rtol=1e-4)

    # --- larger batch exercising the multi-tile parallel grid (2 tiles x 1024 rows) ---
    B2 = 256
    idx2 = jax.random.randint(k2, (B2, block_size), 0, vocab_size, dtype=jnp.int32)
    logits_big, _ = bigram_forward(idx2, fused, targets=None)
    logits_big = jax.block_until_ready(logits_big)
    assert jnp.allclose(logits_big, reference_fused(idx2, fused), atol=1e-4, rtol=1e-4)

    # --- ragged batch exercising row padding + pad-row masking inside the fused loss ---
    B3 = 37
    idx3 = jax.random.randint(k3, (B3, block_size), 0, vocab_size, dtype=jnp.int32)
    tgt3 = jax.random.randint(tkey2, (B3, block_size), 0, vocab_size, dtype=jnp.int32)
    logits3, loss3 = bigram_forward(idx3, fused, targets=tgt3)
    loss3 = jax.block_until_ready(loss3)
    assert jnp.allclose(loss3, _reference_loss(idx3, tgt3, fused), atol=1e-4, rtol=1e-4)
    assert jnp.allclose(logits3, reference_fused(idx3, fused).reshape(-1, vocab_size),
                        atol=1e-4, rtol=1e-4)

    print("KERNEL_OK")
</pallas_src>

<mosaic_0001>
module attributes {stable_mosaic.version = 11 : i64} {
  func.func @bigram_logits_kernel(%arg0: i32, %arg1: memref<1x8x8xi32, #tpu.memory_space<vmem>>, %arg2: memref<128x128xbf16, #tpu.memory_space<vmem>>, %arg3: memref<8x128xf32, #tpu.memory_space<vmem>>, %arg4: memref<8x128xf32, #tpu.memory_space<vmem>>) attributes {dimension_semantics = [#tpu.dimension_semantics<parallel>], iteration_bounds = array<i64: 2>, scalar_prefetch = 0 : i64, scratch_operands = 0 : i64, tpu.core_type = #tpu.core_type<tc>, window_params = [{transform_indices = @transform_0, window_bounds = array<i64: 1, 8, 8>}, {pipeline_mode = #tpu.pipeline_mode<synchronous>, transform_indices = @transform_1, window_bounds = array<i64: 128, 128>}, {pipeline_mode = #tpu.pipeline_mode<synchronous>, transform_indices = @transform_2, window_bounds = array<i64: 8, 128>}, {transform_indices = @transform_3, window_bounds = array<i64: 8, 128>}]} {
    %c0 = arith.constant 0 : index
    %c0_0 = arith.constant 0 : index
    %c0_1 = arith.constant 0 : index
    %0 = vector.load %arg1[%c0, %c0_0, %c0_1] : memref<1x8x8xi32, #tpu.memory_space<vmem>>, vector<1x8x8xi32>
    %1 = vector.extract_strided_slice %0 {offsets = [0, 0, 0], sizes = [1, 1, 8], strides = [1, 1, 1]} : vector<1x8x8xi32> to vector<1x1x8xi32>
    %2 = vector.shape_cast %1 : vector<1x1x8xi32> to vector<1x8xi32>
    %3 = tpu.iota {dimensions = array<i32: 0>} : vector<128x8xi32>
    %4 = vector.broadcast %2 : vector<1x8xi32> to vector<128x8xi32>
    %5 = arith.cmpi eq, %3, %4 : vector<128x8xi32>
    %6 = arith.extui %5 : vector<128x8xi1> to vector<128x8xi32>
    %7 = arith.sitofp %6 : vector<128x8xi32> to vector<128x8xf32>
    %8 = arith.truncf %7 : vector<128x8xf32> to vector<128x8xbf16>
    %c0_2 = arith.constant 0 : index
    %c0_3 = arith.constant 0 : index
    %9 = vector.load %arg2[%c0_2, %c0_3] : memref<128x128xbf16, #tpu.memory_space<vmem>>, vector<128x128xbf16>
    %cst = arith.constant dense<0.000000e+00> : vector<8x128xf32>
    %10 = tpu.matmul %8, %9, %cst {dimension_numbers = #tpu.dot_dimension_numbers<[0], [0], [1], [1], [0, 1, 1, 1], [], []>} : vector<128x8xbf16>, vector<128x128xbf16>, vector<8x128xf32> -> vector<8x128xf32>
    %11 = vector.shape_cast %10 : vector<8x128xf32> to vector<1x8x128xf32>
    %c0_4 = arith.constant 0 : index
    %c0_5 = arith.constant 0 : index
    %12 = vector.load %arg3[%c0_4, %c0_5] : memref<8x128xf32, #tpu.memory_space<vmem>>, vector<8x128xf32>
    %13 = vector.shape_cast %12 : vector<8x128xf32> to vector<1x8x128xf32>
    %14 = arith.addf %11, %13 : vector<1x8x128xf32>
    %15 = vector.shape_cast %14 : vector<1x8x128xf32> to vector<8x128xf32>
    %16 = tpu.iota {dimensions = array<i32: 1>} : vector<8x128xi32>
    %c65_i32 = arith.constant 65 : i32
    %17 = vector.broadcast %c65_i32 : i32 to vector<8x128xi32>
    %18 = arith.cmpi slt, %16, %17 : vector<8x128xi32>
    %cst_6 = arith.constant -1.000000e+30 : f32
    %19 = vector.broadcast %cst_6 : f32 to vector<8x128xf32>
    %20 = arith.select %18, %15, %19 : vector<8x128xi1>, vector<8x128xf32>
    %c0_7 = arith.constant 0 : index
    %c0_8 = arith.constant 0 : index
    %21 = vector.load %arg4[%c0_7, %c0_8] : memref<8x128xf32, #tpu.memory_space<vmem>>, vector<8x128xf32>
    tpu.vector_store %arg4[%c0_7, %c0_8], %20 {strides = array<i32>} : memref<8x128xf32, #tpu.memory_space<vmem>>, vector<8x128xf32>,
    return
  }
  func.func @transform_0(%arg0: i32) -> (i32, i32, i32) {
    %c0_i32 = arith.constant 0 : i32
    %c0_i32_0 = arith.constant 0 : i32
    %c0_i32_1 = arith.constant 0 : i32
    return %arg0, %c0_i32, %c0_i32_0 : i32, i32, i32
  }
  func.func @transform_1(%arg0: i32) -> (i32, i32) {
    %c0_i32 = arith.constant 0 : i32
    %c0_i32_0 = arith.constant 0 : i32
    %c0_i32_1 = arith.constant 0 : i32
    return %c0_i32, %c0_i32_0 : i32, i32
  }
  func.func @transform_2(%arg0: i32) -> (i32, i32) {
    %c0_i32 = arith.constant 0 : i32
    %c0_i32_0 = arith.constant 0 : i32
    %c0_i32_1 = arith.constant 0 : i32
    return %c0_i32, %c0_i32_0 : i32, i32
  }
  func.func @transform_3(%arg0: i32) -> (i32, i32) {
    %c0_i32 = arith.constant 0 : i32
    %c0_i32_0 = arith.constant 0 : i32
    return %arg0, %c0_i32 : i32, i32
  }
}

</mosaic_0001>

<llo_original>
// kernel: tpu_custom_call.1
$region0: #{tpu_custom_call.1}
  #allocation0 [shape = 'u32[]', space=smem, size = 0x4, offset = 0x4, fixed_abs, tag = 'smem constant byte address 0x4 - core index']
  #allocation1 [shape = 'u32[72,128]{1,0:T(1,128)}', space=vmem, size = 0x9000, scoped, tag = 'internal scratch']
  %s0 = inlined_call_operand.hbm [shape: s32[2,8,8], index: 0, kind: input, shape index: {}]
  %s1 = inlined_call_operand.hbm [shape: bf16[128,128], index: 1, kind: input, shape index: {}]
  %s2 = inlined_call_operand.hbm [shape: f32[8,128], index: 2, kind: input, shape index: {}]
  %s3 = inlined_call_operand.hbm [shape: f32[16,128], index: 3, kind: output, shape index: {}]
  %s4 = sld [smem:[#allocation0]]
  $region57: #{tpu_custom_call.1} parent=0
    _
  %s6 = ssub.s32 1, %s4
  %s7 = scalar_select 0, %s6, %s4
  $region1: #{tpu_custom_call.1} parent=0
    #allocation2 [shape = 'u8[8192]{0}', space=vmem, size = 0x2000, scoped, tag = 'input window, operand 0']
    #allocation3 [shape = 's32[2]{0}', space=sflag, size = 0x8, scoped, tag = 'scoped memory for tpu_custom_call.1']
    #allocation4 [shape = 's32[2]{0}', space=sflag, size = 0x8, scoped, tag = 'scoped memory for tpu_custom_call.1']
    #allocation5 [shape = 'u8[32768]{0}', space=vmem, size = 0x8000, scoped, tag = 'input window, operand 1, single buffered']
    #allocation6 [shape = 's32[1]{0}', space=sflag, size = 0x4, scoped, tag = 'scoped memory for tpu_custom_call.1']
    #allocation7 [shape = 'u8[4096]{0}', space=vmem, size = 0x1000, scoped, tag = 'input window, operand 2, single buffered']
    #allocation8 [shape = 'u8[8192]{0}', space=vmem, size = 0x2000, scoped, tag = 'output window, operand 0']
    %8 = vsyncpa [#allocation3], 0
    %s9 = scalar_lea.sflag [#allocation3], 1
    %10 = vsyncpa %s9, 0
    %11 = vsyncpa [#allocation6], 0
    %12 = vsyncpa [#allocation4], 0
    %s13 = scalar_lea.sflag [#allocation4], 1
    %14 = vsyncpa %s13, 0
    loop: start=0, step=1, limit=4
    $region2: #{tpu_custom_call.1} parent=1 // loop_pre_header
      _
    $region3: #{tpu_custom_call.1} parent=1 // loop_header
      %s16 = sphi 0, %s20
      %p17 = scmp.ge.s32.totalorder %s16, 4
      %s26 = sphi 0, %s28
      %s29 = sphi 0, %s26
      %s30 = sphi 0, %s29
      %s46 = sphi 0, %s30
      %s50 = sphi 0, %s50
      %s52 = sphi 0, %s50
      %s53 = sphi 0, %s52
      %s67 = sphi 0, %s53
      %s71 = sphi 0, %s71
      %s73 = sphi 0, %s71
      %s74 = sphi 0, %s73
      %s88 = sphi 0, %s74
      %s94 = sphi 0, %s96
      %s97 = sphi 0, %s94
      %s98 = sphi 0, %s97
      %s114 = sphi 0, %s98
    $region4: #{tpu_custom_call.1} parent=1 // loop_header_branch
      %19 = sbr.rel (%p17) target = $region8
    $region5: #{tpu_custom_call.1} parent=1 // loop_body
      %s21 = ssub.s32 %s16, 1
      %s22 = ssub.s32 %s16, 2
      %s23 = sadd.s32 %s16, 1
      %s24 = ssub.s32 %s16, %s23
      %p25 = scmp.eq.s32.totalorder %s24, 0
      %s27 = sadd.s32 %s26, 1
      %s28 = scalar_select %p25, %s26, %s27
      %p31 = pneg %p25
      %p32 = scmp.eq.s32.totalorder %s16, 1
      %p33 = por %p31, %p32
      %p34 = scmp.ne.s32.totalorder %s26, %s29
      %p35 = scmp.eq.s32.totalorder %s16, 0
      %p36 = por %p34, %p35
      %p37 = scmp.ne.s32.totalorder %s26, %s29
      %p38 = scmp.eq.s32.totalorder %s21, 1
      %p39 = por %p37, %p38
      %p40 = scmp.ne.s32.totalorder %s29, %s30
      %p41 = scmp.eq.s32.totalorder %s21, 0
      %p42 = por %p40, %p41
      %p43 = scmp.ne.s32.totalorder %s29, %s30
      %p44 = scmp.eq.s32.totalorder %s22, 1
      %p45 = por %p43, %p44
      %p47 = scmp.ne.s32.totalorder %s30, %s46
      %p48 = scmp.eq.s32.totalorder %s22, 0
      %p49 = por %p47, %p48
      %s51 = sadd.s32 %s50, 1
      %p54 = scmp.eq.s32.totalorder %s16, 1
      %p55 = scmp.ne.s32.totalorder %s50, %s52
      %p56 = scmp.eq.s32.totalorder %s16, 0
      %p57 = por %p55, %p56
      %p58 = scmp.ne.s32.totalorder %s50, %s52
      %p59 = scmp.eq.s32.totalorder %s21, 1
      %p60 = por %p58, %p59
      %p61 = scmp.ne.s32.totalorder %s52, %s53
      %p62 = scmp.eq.s32.totalorder %s21, 0
      %p63 = por %p61, %p62
      %p64 = scmp.ne.s32.totalorder %s52, %s53
      %p65 = scmp.eq.s32.totalorder %s22, 1
      %p66 = por %p64, %p65
      %p68 = scmp.ne.s32.totalorder %s53, %s67
      %p69 = scmp.eq.s32.totalorder %s22, 0
      %p70 = por %p68, %p69
      %s72 = sadd.s32 %s71, 1
      %p75 = scmp.eq.s32.totalorder %s16, 1
      %p76 = scmp.ne.s32.totalorder %s71, %s73
      %p77 = scmp.eq.s32.totalorder %s16, 0
      %p78 = por %p76, %p77
      %p79 = scmp.ne.s32.totalorder %s71, %s73
      %p80 = scmp.eq.s32.totalorder %s21, 1
      %p81 = por %p79, %p80
      %p82 = scmp.ne.s32.totalorder %s73, %s74
      %p83 = scmp.eq.s32.totalorder %s21, 0
      %p84 = por %p82, %p83
      %p85 = scmp.ne.s32.totalorder %s73, %s74
      %p86 = scmp.eq.s32.totalorder %s22, 1
      %p87 = por %p85, %p86
      %p89 = scmp.ne.s32.totalorder %s74, %s88
      %p90 = scmp.eq.s32.totalorder %s22, 0
      %p91 = por %p89, %p90
      %s92 = ssub.s32 %s16, %s23
      %p93 = scmp.eq.s32.totalorder %s92, 0
      %s95 = sadd.s32 %s94, 1
      %s96 = scalar_select %p93, %s94, %s95
      %p99 = pneg %p93
      %p100 = scmp.eq.s32.totalorder %s16, 1
      %p101 = por %p99, %p100
      %p102 = scmp.ne.s32.totalorder %s94, %s97
      %p103 = scmp.eq.s32.totalorder %s16, 0
      %p104 = por %p102, %p103
      %p105 = scmp.ne.s32.totalorder %s94, %s97
      %p106 = scmp.eq.s32.totalorder %s21, 1
      %p107 = por %p105, %p106
      %p108 = scmp.ne.s32.totalorder %s97, %s98
      %p109 = scmp.eq.s32.totalorder %s21, 0
      %p110 = por %p108, %p109
      %p111 = scmp.ne.s32.totalorder %s97, %s98
      %p112 = scmp.eq.s32.totalorder %s22, 1
      %p113 = por %p111, %p112
      %p115 = scmp.ne.s32.totalorder %s98, %s114
      %p116 = scmp.eq.s32.totalorder %s22, 0
      %p117 = por %p115, %p116
      %p118 = scmp.le.s32.totalorder 1, %s16
      %p119 = scmp.lt.s32.totalorder %s16, 3
      %p120 = pnand %p118, %p119
      %p121 = pneg %p120
      // Predicated region
      $region9: #{tpu_custom_call.1} parent=5 // pred_check
        _
      $region10: #{tpu_custom_call.1} parent=5 // pred_check_branch
        %123 = sbr.rel (%p120) target = $region12
      $region11: #{tpu_custom_call.1} parent=5 // pred_region
        %s124 = ssub.s32 %s16, 1
        // Predicated region
        $region13: #{tpu_custom_call.1} parent=11 // pred_check
          %p125 = pneg %p63
        $region14: #{tpu_custom_call.1} parent=11 // pred_check_branch
          %127 = sbr.rel (%p125) target = $region16
        $region15: #{tpu_custom_call.1} parent=11 // pred_region
          %129 = vsyncadd [#allocation6], 0
          %s130 = sshll.u32 %s1, 4
          %s131 = int_to_ptr.hbm [resolvable:$true] %s130
          %s132 = sshll.u32 [#allocation5], 4
          %s133 = int_to_ptr.vmem [resolvable:$true] %s132
          %138 = dma.hbm_to_vmem [thread:$0]  %s131, 1024, %s133, [#allocation6], 64, 64, 4
        $region16: #{tpu_custom_call.1} parent=11 // pred_fallthru
          _
        // Predicated region
        $region17: #{tpu_custom_call.1} parent=11 // pred_check
          %p139 = pneg %p84
        $region18: #{tpu_custom_call.1} parent=11 // pred_check_branch
          %141 = sbr.rel (%p139) target = $region20
        $region19: #{tpu_custom_call.1} parent=11 // pred_region
          %143 = vsyncadd [#allocation6], 0
          %s145 = sshll.u32 %s2, 4
          %s146 = int_to_ptr.hbm [resolvable:$true] %s145
          %s147 = sshll.u32 [#allocation7], 4
          %s148 = int_to_ptr.vmem [resolvable:$true] %s147
          %150 = dma.hbm_to_vmem [thread:$0]  %s146, 128, %s148, [#allocation6]
        $region20: #{tpu_custom_call.1} parent=11 // pred_fallthru
          _
      $region12: #{tpu_custom_call.1} parent=5 // pred_fallthru
        _
      %p151 = scmp.lt.s32.totalorder %s16, 2
      // Predicated region
      $region21: #{tpu_custom_call.1} parent=5 // pred_check
        %p152 = pneg %p151
      $region22: #{tpu_custom_call.1} parent=5 // pred_check_branch
        %154 = sbr.rel (%p152) target = $region24
      $region23: #{tpu_custom_call.1} parent=5 // pred_region
        // Predicated region
        $region25: #{tpu_custom_call.1} parent=23 // pred_check
          %p155 = pneg %p36
        $region26: #{tpu_custom_call.1} parent=23 // pred_check_branch
          %157 = sbr.rel (%p155) target = $region28
        $region27: #{tpu_custom_call.1} parent=23 // pred_region
          %s158 = sand.u32 %s26, 1
          %s159 = scalar_lea.sflag [#allocation3], %s158
          %s160 = sand.u32 %s26, 1
          %s161 = smul.addr %s160, 8
          %s162 = scalar_lea.vmem [#allocation2], %s161
          %164 = vsyncadd %s159, 0
          %s165 = smul.addr %s16, 8
          %s166 = scalar_lea.hbm %s0, %s165
          %s168 = sshll.u32 %s166, 4
          %s169 = int_to_ptr.hbm [resolvable:$true] %s168
          %s170 = sshll.u32 %s162, 4
          %s171 = int_to_ptr.vmem [resolvable:$true] %s170
          %173 = dma.hbm_to_vmem [thread:$0]  %s169, 128, %s171, %s159
        $region28: #{tpu_custom_call.1} parent=23 // pred_fallthru
          _
      $region24: #{tpu_custom_call.1} parent=5 // pred_fallthru
        _
      %p174 = scmp.le.s32.totalorder 1, %s16
      %p175 = scmp.lt.s32.totalorder %s16, 3
      %p176 = pnand %p174, %p175
      %p177 = pneg %p176
      // Predicated region
      $region29: #{tpu_custom_call.1} parent=5 // pred_check
        _
      $region30: #{tpu_custom_call.1} parent=5 // pred_check_branch
        %179 = sbr.rel (%p176) target = $region32
      $region31: #{tpu_custom_call.1} parent=5 // pred_region
        %s180 = ssub.s32 %s16, 1
        %s181 = sand.u32 %s29, 1
        %s182 = scalar_lea.sflag [#allocation3], %s181
        %s183 = sand.u32 %s29, 1
        %s184 = smul.addr %s183, 8
        %s185 = scalar_lea.vmem [#allocation2], %s184
        // Predicated region
        $region33: #{tpu_custom_call.1} parent=31 // pred_check
          %p186 = pneg %p42
        $region34: #{tpu_custom_call.1} parent=31 // pred_check_branch
          %188 = sbr.rel (%p186) target = $region36
        $region35: #{tpu_custom_call.1} parent=31 // pred_region
          %190 = dma.done %s182, 128
        $region36: #{tpu_custom_call.1} parent=31 // pred_fallthru
          _
        // Predicated region
        $region37: #{tpu_custom_call.1} parent=31 // pred_check
          %p191 = pneg %p63
        $region38: #{tpu_custom_call.1} parent=31 // pred_check_branch
          %193 = sbr.rel (%p191) target = $region40
        $region39: #{tpu_custom_call.1} parent=31 // pred_region
          %195 = dma.done [#allocation6], 1024
        $region40: #{tpu_custom_call.1} parent=31 // pred_fallthru
          _
        // Predicated region
        $region41: #{tpu_custom_call.1} parent=31 // pred_check
          %p196 = pneg %p84
        $region42: #{tpu_custom_call.1} parent=31 // pred_check_branch
          %198 = sbr.rel (%p196) target = $region44
        $region43: #{tpu_custom_call.1} parent=31 // pred_region
          %200 = dma.done [#allocation6], 128
        $region44: #{tpu_custom_call.1} parent=31 // pred_fallthru
          _
        %s201 = sand.u32 %s29, 1
        %s202 = scalar_lea.sflag [#allocation3], %s201
        %s203 = sand.u32 %s29, 1
        %s204 = smul.addr %s203, 8
        %s205 = scalar_lea.vmem [#allocation2], %s204
        %p206 = pneg %p42
        %p207 = pneg %p39
        %p208 = pneg %p63
        %p209 = pneg %p60
        %p210 = pneg %p84
        %p211 = pneg %p81
        %p212 = pneg %p110
        %p213 = pneg %p107
        %s214 = sand.u32 %s97, 1
        %s215 = scalar_lea.sflag [#allocation4], %s214
        %s216 = sand.u32 %s97, 1
        %s217 = smul.addr %s216, 8
        %s218 = scalar_lea.vmem [#allocation8], %s217
        %v219 = vld [vmem:[%s185] sm:$0xff]
        %v220 = vlaneseq
        %v221 = vshrl.u32 %v220, 7
        %v222 = vadd.s32 %v221, 8
        %v223 = vadd.s32 %v221, 16
        %v224 = vadd.s32 %v221, 24
        %v225 = vadd.s32 %v221, 32
        %v226 = vadd.s32 %v221, 40
        %v227 = vadd.s32 %v221, 48
        %v228 = vadd.s32 %v221, 56
        %v229 = vadd.s32 %v221, 64
        %v230 = vadd.s32 %v221, 72
        %v231 = vadd.s32 %v221, 80
        %v232 = vadd.s32 %v221, 88
        %v233 = vadd.s32 %v221, 96
        %v234 = vadd.s32 %v221, 104
        %v235 = vadd.s32 %v221, 112
        %v236 = vadd.s32 %v221, 120
        %v237 = vperm.slane %v219, 0
        %vm238 = vcmp.eq.s32.totalorder %v221, %v237
        %vm239 = vcmp.eq.s32.totalorder %v222, %v237
        %vm240 = vcmp.eq.s32.totalorder %v223, %v237
        %vm241 = vcmp.eq.s32.totalorder %v224, %v237
        %vm242 = vcmp.eq.s32.totalorder %v225, %v237
        %vm243 = vcmp.eq.s32.totalorder %v226, %v237
        %vm244 = vcmp.eq.s32.totalorder %v227, %v237
        %vm245 = vcmp.eq.s32.totalorder %v228, %v237
        %vm246 = vcmp.eq.s32.totalorder %v229, %v237
        %vm247 = vcmp.eq.s32.totalorder %v230, %v237
        %vm248 = vcmp.eq.s32.totalorder %v231, %v237
        %vm249 = vcmp.eq.s32.totalorder %v232, %v237
        %vm250 = vcmp.eq.s32.totalorder %v233, %v237
        %vm251 = vcmp.eq.s32.totalorder %v234, %v237
        %vm252 = vcmp.eq.s32.totalorder %v235, %v237
        %vm253 = vcmp.eq.s32.totalorder %v236, %v237
        %v254 = vsel %vm238, 1, 0
        %v255 = vsel %vm239, 1, 0
        %v256 = vsel %vm240, 1, 0
        %v257 = vsel %vm241, 1, 0
        %v258 = vsel %vm242, 1, 0
        %v259 = vsel %vm243, 1, 0
        %v260 = vsel %vm244, 1, 0
        %v261 = vsel %vm245, 1, 0
        %v262 = vsel %vm246, 1, 0
        %v263 = vsel %vm247, 1, 0
        %v264 = vsel %vm248, 1, 0
        %v265 = vsel %vm249, 1, 0
        %v266 = vsel %vm250, 1, 0
        %v267 = vsel %vm251, 1, 0
        %v268 = vsel %vm252, 1, 0
        %v269 = vsel %vm253, 1, 0
        %v270 = vcvt.s32.f32 %v254
        %v271 = vcvt.s32.f32 %v255
        %v272 = vcvt.s32.f32 %v256
        %v273 = vcvt.s32.f32 %v257
        %v274 = vcvt.s32.f32 %v258
        %v275 = vcvt.s32.f32 %v259
        %v276 = vcvt.s32.f32 %v260
        %v277 = vcvt.s32.f32 %v261
        %v278 = vcvt.s32.f32 %v262
        %v279 = vcvt.s32.f32 %v263
        %v280 = vcvt.s32.f32 %v264
        %v281 = vcvt.s32.f32 %v265
        %v282 = vcvt.s32.f32 %v266
        %v283 = vcvt.s32.f32 %v267
        %v284 = vcvt.s32.f32 %v268
        %v285 = vcvt.s32.f32 %v269
        %v286 = vpack.c.bf16 %v271, %v270
        %v287 = vpack.c.bf16 %v273, %v272
        %v288 = vpack.c.bf16 %v275, %v274
        %v289 = vpack.c.bf16 %v277, %v276
        %v290 = vpack.c.bf16 %v279, %v278
        %v291 = vpack.c.bf16 %v281, %v280
        %v292 = vpack.c.bf16 %v283, %v282
        %v293 = vpack.c.bf16 %v285, %v284
        %v294 = vld [vmem:[#allocation5] sm:$0xf]
        %v295 = vld [vmem:[#allocation5 + $0x4] sm:$0xf]
        %v296 = vld [vmem:[#allocation5 + $0x8] sm:$0xf]
        %v297 = vld [vmem:[#allocation5 + $0xc] sm:$0xf]
        %v298 = vld [vmem:[#allocation5 + $0x10] sm:$0xf]
        %v299 = vld [vmem:[#allocation5 + $0x14] sm:$0xf]
        %v300 = vld [vmem:[#allocation5 + $0x18] sm:$0xf]
        %v301 = vld [vmem:[#allocation5 + $0x1c] sm:$0xf]
        %v302 = vld [vmem:[#allocation5 + $0x20] sm:$0xf]
        %v303 = vld [vmem:[#allocation5 + $0x24] sm:$0xf]
        %v304 = vld [vmem:[#allocation5 + $0x28] sm:$0xf]
        %v305 = vld [vmem:[#allocation5 + $0x2c] sm:$0xf]
        %v306 = vld [vmem:[#allocation5 + $0x30] sm:$0xf]
        %v307 = vld [vmem:[#allocation5 + $0x34] sm:$0xf]
        %v308 = vld [vmem:[#allocation5 + $0x38] sm:$0xf]
        %v309 = vld [vmem:[#allocation5 + $0x3c] sm:$0xf]
        %310 = vxpose.xlu0.c.b16.start [1/8] %v286, 128
        %311 = vxpose.xlu0.c.b16.cont [2/8] %v287, 128
        %312 = vxpose.xlu0.c.b16.cont [3/8] %v288, 128
        %313 = vxpose.xlu0.c.b16.cont [4/8] %v289, 128
        %314 = vxpose.xlu0.c.b16.cont [5/8] %v290, 128
        %315 = vxpose.xlu0.c.b16.cont [6/8] %v291, 128
        %316 = vxpose.xlu0.c.b16.cont [7/8] %v292, 128
        %317 = vxpose.xlu0.c.b16.end [8/8] %v293, 128
        %v318 = vpop.trf.xlu0
        %v319 = vpop.trf.xlu0
        %v320 = vpop.trf.xlu0
        %v321 = vpop.trf.xlu0
        %v322 = vpop.trf.xlu0
        %v323 = vpop.trf.xlu0
        %v324 = vpop.trf.xlu0
        %v325 = vpop.trf.xlu0
        %v342 = vunpack.c.l.b16 %v294
        %v343 = vunpack.c.l.b16 %v295
        %v344 = vunpack.c.l.b16 %v296
        %v345 = vunpack.c.l.b16 %v297
        %v346 = vunpack.c.l.b16 %v298
        %v347 = vunpack.c.l.b16 %v299
        %v348 = vunpack.c.l.b16 %v300
        %v349 = vunpack.c.l.b16 %v301
        %v350 = vunpack.c.l.b16 %v302
        %v351 = vunpack.c.l.b16 %v303
        %v352 = vunpack.c.l.b16 %v304
        %v353 = vunpack.c.l.b16 %v305
        %v354 = vunpack.c.l.b16 %v306
        %v355 = vunpack.c.l.b16 %v307
        %v356 = vunpack.c.l.b16 %v308
        %v357 = vunpack.c.l.b16 %v309
        %v358 = vpack.c.b16 %v343, %v342
        %v359 = vpack.c.b16 %v345, %v344
        %v360 = vpack.c.b16 %v347, %v346
        %v361 = vpack.c.b16 %v349, %v348
        %v362 = vpack.c.b16 %v351, %v350
        %v363 = vpack.c.b16 %v353, %v352
        %v364 = vpack.c.b16 %v355, %v354
        %v365 = vpack.c.b16 %v357, %v356
        %374 = vmatpush.bf16.msra.mxu0 %v365
        %375 = vmatpush.bf16.msra.mxu0 %v364
        %376 = vmatpush.bf16.msra.mxu0 %v363
        %377 = vmatpush.bf16.msra.mxu0 %v362
        %378 = vmatpush.bf16.msra.mxu0 %v361
        %379 = vmatpush.bf16.msra.mxu0 %v360
        %380 = vmatpush.bf16.msra.mxu0 %v359
        %381 = vmatpush.bf16.msra.mxu0 %v358
        %382 = vmatmul.bf16.gmra.mxu0 %v318
        %v383 = vpop.f32.mrf.mxu0
        %v384 = vadd.f32 0.0, %v383
        %v385 = vpop.f32.mrf.mxu0
        %386 = vdwg.mxu0
        %v387 = vld [vmem:[#allocation7] sm:$0xff]
        %v388 = vadd.f32 %v384, %v387
        %v389 = vlaneseq
        %v390 = vand.u32 %v389, 127
        %vm391 = vcmp.lt.s32.totalorder %v390, 65
        %v392 = vsel %vm391, %v388, -1e+30
        %393 = vst [vmem:[%s218] sm:$0xff] %v392
        %s394 = sand.u32 %s97, 1
        %s395 = scalar_lea.sflag [#allocation4], %s394
        %s396 = sand.u32 %s97, 1
        %s397 = smul.addr %s396, 8
        %s398 = scalar_lea.vmem [#allocation8], %s397
        // Predicated region
        $region45: #{tpu_custom_call.1} parent=31 // pred_check
          %p399 = pneg %p107
        $region46: #{tpu_custom_call.1} parent=31 // pred_check_branch
          %401 = sbr.rel (%p399) target = $region48
        $region47: #{tpu_custom_call.1} parent=31 // pred_region
          %403 = vsyncadd %s395, 0
          %s404 = smul.addr %s21, 8
          %s405 = scalar_lea.hbm %s3, %s404
          %s407 = sshll.u32 %s398, 4
          %s408 = int_to_ptr.vmem [resolvable:$true] %s407
          %s409 = sshll.u32 %s405, 4
          %s410 = int_to_ptr.hbm [resolvable:$true] %s409
          %412 = dma.vmem_to_hbm [thread:$0]  %s408, 128, %s410, %s395
        $region48: #{tpu_custom_call.1} parent=31 // pred_fallthru
          _
      $region32: #{tpu_custom_call.1} parent=5 // pred_fallthru
        _
      %p413 = scmp.le.s32.totalorder 2, %s16
      // Predicated region
      $region49: #{tpu_custom_call.1} parent=5 // pred_check
        %p414 = pneg %p413
      $region50: #{tpu_custom_call.1} parent=5 // pred_check_branch
        %416 = sbr.rel (%p414) target = $region52
      $region51: #{tpu_custom_call.1} parent=5 // pred_region
        %s417 = ssub.s32 %s16, 2
        // Predicated region
        $region53: #{tpu_custom_call.1} parent=51 // pred_check
          %p418 = pneg %p113
        $region54: #{tpu_custom_call.1} parent=51 // pred_check_branch
          %420 = sbr.rel (%p418) target = $region56
        $region55: #{tpu_custom_call.1} parent=51 // pred_region
          %s421 = sand.u32 %s98, 1
          %s422 = scalar_lea.sflag [#allocation4], %s421
          %s423 = sand.u32 %s98, 1
          %s424 = smul.addr %s423, 8
          %s425 = scalar_lea.vmem [#allocation8], %s424
          %427 = dma.done %s422, 128
        $region56: #{tpu_custom_call.1} parent=51 // pred_fallthru
          _
      $region52: #{tpu_custom_call.1} parent=5 // pred_fallthru
        _
    $region6: #{tpu_custom_call.1} parent=1 // loop_footer
      %s20 = sadd.s32 1, %s16
    $region7: #{tpu_custom_call.1} parent=1 // loop_footer_branch
      %15 = sbr.rel target = $region3
    $region8: #{tpu_custom_call.1} parent=1 // loop_exit
      _
    %428 = vsyncpa [#allocation3], 1
    %s429 = scalar_lea.sflag [#allocation3], 1
    %430 = vsyncpa %s429, 1
    %431 = vsyncpa [#allocation6], 1
    %432 = vsyncpa [#allocation4], 1
    %s433 = scalar_lea.sflag [#allocation4], 1
    %434 = vsyncpa %s433, 1

</llo_original>
